<compile_context>
chip_gen: v6e
topology: v6e:2x2x1
jax: 0.10.0
libtpu: 0.0.40
codegen_flags: <defaults>
</compile_context>

<pallas_src>
import functools

import jax
import jax.numpy as jnp
from jax.experimental import pallas as pl
from jax.experimental.pallas import tpu as pltpu

WEIGHT_CENT = 0.001   # self.weight_cent
TAU = 1.0             # self.tau
ETA = 2.0             # self.eta


def _round_up(x, m):
    return ((x + m - 1) // m) * m


def _vmem_capacity_bytes():
    try:
        return int(pltpu.get_tpu_info().vmem_capacity_bytes)
    except Exception:
        return 64 * 1024 * 1024   # v7x-safe default


def _pick_tile_n(d, c_pad, n, xf_itemsize, tbl_itemsize, budget_bytes, row_align):
    """Pick a batch-tile size that keeps the double-buffered xf/target streams,
    the resident class tables, and in-kernel f32 temporaries inside
    `budget_bytes` of VMEM, while keeping each xf block >= ~2 MiB so the fixed
    per-grid-step overhead is amortized."""
    # Resident class tables: fused gather table [Cp, Cp+D] f32 + mnorm.T [D,Cp]
    # (double-buffered by the default pipeline even though their block index is
    # constant).
    resident = 2 * (c_pad * (c_pad + d) * 4 + d * c_pad * tbl_itemsize)
    # Per batch row: double-buffered xf tile + target column, plus f32
    # temporaries (xf/centers/diff/xf_n ~ 3*D, onehot/gathered/samp/b/dd ~ 6*Cp).
    per_row = 2 * (d * xf_itemsize + 4) + (3 * d + 6 * c_pad) * 4
    avail = max(budget_bytes - resident, 0)
    tile = avail // per_row if avail > 8 * per_row else row_align
    # Bytes-based clamp: aim for xf blocks of a few MiB, no need to go beyond.
    hi = max(512, (4 << 20) // max(1, d * xf_itemsize))
    tile = min(tile, hi)
    tile = min(tile, _round_up(max(n, 1), row_align))  # don't over-pad tiny batches
    tile = max(row_align, (tile // row_align) * row_align)
    return int(tile)


def make_group_loss_tables(matrix, graph_weight_matrix, mxu_dtype=jnp.float32):
    """Builds the VMEM-resident per-class tables. O(C*D + C^2); hoist/cache
    this (pass via `tables=`) when matrix / graph_weight_matrix are static."""
    matrix_f32 = matrix.astype(jnp.float32)
    c, d = matrix_f32.shape
    c_pad = _round_up(c, 128)

    mnorm = matrix_f32 * jax.lax.rsqrt(
        jnp.sum(matrix_f32 * matrix_f32, axis=-1, keepdims=True))
    a_tbl = jnp.exp(graph_weight_matrix.astype(jnp.float32) / TAU)

    if c_pad == c:                               # identity fast path (no padding)
        a_part = a_tbl
        m_part = matrix_f32
        mnorm_t = mnorm.T.astype(mxu_dtype)
    else:
        # Padded class columns/rows hold 1.0 in the exp-table part so that
        # (a - exp(0/tau)) == 0 there; padded matrix rows are 0.
        a_part = jnp.ones((c_pad, c_pad), jnp.float32).at[:c, :c].set(a_tbl)
        m_part = jnp.zeros((c_pad, d), jnp.float32).at[:c, :].set(matrix_f32)
        mnorm_t = jnp.zeros((d, c_pad), mxu_dtype).at[:, :c].set(
            mnorm.T.astype(mxu_dtype))

    fused_tbl = jnp.concatenate([a_part, m_part], axis=1)   # [Cp, Cp + D] f32
    return fused_tbl, mnorm_t


def _group_loss_kernel(tgt_ref, xf_ref, fused_ref, mnorm_t_ref, out_ref,
                       *, tile_n, n_valid):
    """One batch tile of IRCGL + ICGL.

    tgt_ref:     [T, 1]       int32    target labels for this tile
    xf_ref:      [T, D]       native   features (upcast in-kernel)
    fused_ref:   [Cp, Cp+D]   float32  [exp(graph/tau) | matrix] (VMEM-resident)
    mnorm_t_ref: [D, Cp]      f32/bf16 (matrix / ||matrix||).T (VMEM-resident)
    out_ref:     [8, 128]     float32  per-tile partial loss (broadcast scalar)
    """
    c_pad = fused_ref.shape[0]

    # Row-validity mask for the ragged (unpadded) batch tail.
    row = jax.lax.broadcasted_iota(jnp.int32, (tile_n, 1), 0)
    valid = (pl.program_id(0) * tile_n + row) < n_valid          # (T, 1) bool
    valid_f = valid.astype(jnp.float32)

    # Upcast + mask in-kernel (garbage tail rows become exact zeros).
    xf = jnp.where(valid, xf_ref[...].astype(jnp.float32), 0.0)  # (T, D)
    tgt = tgt_ref[...]                                           # (T, 1) int32

    # One-hot(target) over the lane-dense padded class axis -> in-kernel gather
    # of [exp-table row | center row] via ONE MXU matmul (fused gather).
    cls = jax.lax.broadcasted_iota(jnp.int32, (tile_n, c_pad), 1)
    onehot = (cls == tgt).astype(jnp.float32)                    # (T, Cp)
    gathered = jnp.dot(onehot, fused_ref[...],
                       preferred_element_type=jnp.float32)       # (T, Cp + D)
    a = gathered[:, :c_pad]                                      # exp(graph)[tgt]
    centers = gathered[:, c_pad:]                                # matrix[tgt]

    # ---- ICG: sum_d (xf - matrix[target])^2 per row ----
    diff = xf - centers
    icg_rows = jnp.sum(diff * diff, axis=-1, keepdims=True)      # (T, 1)

    # ---- IRCG ----
    xfsq = jnp.sum(xf * xf, axis=-1, keepdims=True)              # (T, 1)
    inv_norm = jax.lax.rsqrt(jnp.where(valid, xfsq, 1.0))        # EUP rsqrt
    xf_n = xf * inv_norm
    mxu_dtype = mnorm_t_ref.dtype
    samp = jnp.dot(xf_n.astype(mxu_dtype), mnorm_t_ref[...],
                   preferred_element_type=jnp.float32)           # (T, Cp)
    if TAU != 1.0:                                               # compile-time skip
        samp = samp * (1.0 / TAU)
    b = jnp.exp(samp)
    dd = a - b                                                   # padded cols: 1-1=0
    ircg_rows = jnp.sum(dd * dd, axis=-1, keepdims=True)         # (T, 1)

    part = jnp.sum((WEIGHT_CENT * icg_rows + ETA * ircg_rows) * valid_f,
                   axis=0, keepdims=True)                        # (1, 1)
    out_ref[...] = jnp.broadcast_to(part, (8, 128))


def group_loss_forward(xf, target, matrix, graph_weight_matrix,
                       epoch, start_epoch=1, tile_n=None, tables=None,
                       ircg_matmul_bf16=None):
    """JAX/Pallas equivalent of GroupLoss.forward (eval semantics).

    Returns scalar float32 loss = IRCGL + ICGL (or 0 if epoch < start_epoch).
    `epoch` must be a static Python int.
    """
    if epoch < start_epoch:
        return jnp.float32(0.0)

    n, d = xf.shape
    c = matrix.shape[0]
    c_pad = _round_up(c, 128)

    if ircg_matmul_bf16 is None:
        ircg_matmul_bf16 = (xf.dtype == jnp.bfloat16)
    mxu_dtype = jnp.bfloat16 if ircg_matmul_bf16 else jnp.float32

    if tables is None:
        tables = make_group_loss_tables(matrix, graph_weight_matrix, mxu_dtype)
    fused_tbl, mnorm_t = tables

    xf_bytes = jnp.dtype(xf.dtype).itemsize
    tbl_bytes = jnp.dtype(mnorm_t.dtype).itemsize
    row_align = max(8, 32 // max(1, xf_bytes))     # sublane packing of xf dtype

    vmem_cap = _vmem_capacity_bytes()              # 64 MiB (v7x) / 128 MiB (v5e/v6e)
    vmem_limit = min(int(0.8 * vmem_cap), 100 * 1024 * 1024)

    auto_tile = tile_n is None
    if auto_tile:
        tile_n = _pick_tile_n(d, c_pad, n, xf_bytes, tbl_bytes,
                              vmem_limit - (2 << 20), row_align)
        # Megacore (v7x): make sure there are >= 2 batch tiles so both
        # TensorCores get work under dimension_semantics=("parallel",).
        if tile_n >= n and n > row_align:
            tile_n = max(row_align, _round_up((n + 1) // 2, row_align))
    tile_n = max(8, (int(tile_n) // 8) * 8)

    num_tiles = pl.cdiv(n, tile_n)

    tgt2d = target.astype(jnp.int32).reshape(n, 1)

    kernel = functools.partial(_group_loss_kernel, tile_n=tile_n, n_valid=n)

    partials = pl.pallas_call(
        kernel,
        out_shape=jax.ShapeDtypeStruct((num_tiles * 8, 128), jnp.float32),
        grid_spec=pltpu.PrefetchScalarGridSpec(
            num_scalar_prefetch=0,
            grid=(num_tiles,),
            in_specs=[
                pl.BlockSpec((tile_n, 1), lambda i: (i, 0)),          # target
                pl.BlockSpec((tile_n, d), lambda i: (i, 0)),          # xf (native dtype)
                pl.BlockSpec((c_pad, c_pad + d), lambda i: (0, 0)),   # fused table (resident)
                pl.BlockSpec((d, c_pad), lambda i: (0, 0)),           # mnorm.T (resident)
            ],
            out_specs=pl.BlockSpec((8, 128), lambda i: (i, 0)),
        ),
        compiler_params=pltpu.CompilerParams(
            dimension_semantics=("parallel",),   # shards batch tiles across v7x's 2 TCs
            vmem_limit_bytes=vmem_limit,
        ),
    )(tgt2d, xf, fused_tbl, mnorm_t)

    # Tiny reduction over per-tile partials (row 0 of each tile's 8x128 block);
    # both loss terms are means over N.
    per_tile = partials.reshape(num_tiles, 8, 128)[:, 0, 0]
    return jnp.sum(per_tile) / jnp.float32(n)


def _reference(xf, target, matrix, graph_weight_matrix):
    xf = xf.astype(jnp.float32)
    centers = matrix[target]
    icgl = jnp.mean(jnp.sum((xf - centers) ** 2, axis=-1)) * WEIGHT_CENT
    xf_n = xf / jnp.linalg.norm(xf, axis=-1, keepdims=True)
    m_n = matrix / jnp.linalg.norm(matrix, axis=-1, keepdims=True)
    samp = xf_n @ m_n.T
    a = jnp.exp(graph_weight_matrix[target] / TAU)
    b = jnp.exp(samp / TAU)
    ircgl = jnp.mean(jnp.sum((a - b) ** 2, axis=-1)) * ETA
    return ircgl + icgl


if __name__ == "__main__":
    feat_dim, n_cls, n_samples = 32, 8, 20

    key = jax.random.PRNGKey(0)
    k_mat, k_xf, k_tgt = jax.random.split(key, 3)

    # Deterministic "parameters" (torch.randn equivalent in __init__).
    matrix = jax.random.normal(k_mat, (n_cls, feat_dim), dtype=jnp.float32)
    matrix_norm = matrix / jnp.linalg.norm(matrix, axis=-1, keepdims=True)
    graph_weight_matrix = matrix_norm @ matrix_norm.T          # [n_cls, n_cls]

    # Inputs to forward.
    xf = jax.random.normal(k_xf, (n_samples, feat_dim), dtype=jnp.float32)
    target = jax.random.randint(k_tgt, (n_samples,), 0, n_cls, dtype=jnp.int32)

    ref = _reference(xf, target, matrix, graph_weight_matrix)

    # 1) Small explicit tile -> multi-tile grid with a ragged (masked) tail.
    loss = group_loss_forward(xf, target, matrix, graph_weight_matrix,
                              epoch=1, start_epoch=1, tile_n=8)
    loss = jax.block_until_ready(loss)
    assert jnp.isfinite(loss)
    assert jnp.allclose(loss, ref, rtol=1e-3, atol=1e-3), (loss, ref)

    # 2) Auto-tiled path (picker + >=2-tiles megacore guard).
    loss2 = jax.block_until_ready(
        group_loss_forward(xf, target, matrix, graph_weight_matrix,
                           epoch=1, start_epoch=1))
    assert jnp.allclose(loss2, ref, rtol=1e-3, atol=1e-3), (loss2, ref)

    # 3) Native-bf16 feature stream (half the HBM traffic, bf16 MXU operands
    #    for the similarity matmul, f32 accumulation).
    xf_bf16 = xf.astype(jnp.bfloat16)
    ref_bf16 = _reference(xf_bf16.astype(jnp.float32), target, matrix,
                          graph_weight_matrix)
    loss3 = jax.block_until_ready(
        group_loss_forward(xf_bf16, target, matrix, graph_weight_matrix,
                           epoch=1, start_epoch=1, tile_n=16))
    assert jnp.isfinite(loss3)
    assert jnp.allclose(loss3, ref_bf16, rtol=1e-1, atol=1e-1), (loss3, ref_bf16)

    # 4) epoch gate.
    loss4 = jax.block_until_ready(
        group_loss_forward(xf, target, matrix, graph_weight_matrix,
                           epoch=0, start_epoch=1))
    assert loss4 == 0.0

    print("KERNEL_OK")
</pallas_src>

<mosaic_0001>
module attributes {stable_mosaic.version = 11 : i64} {
  func.func @_group_loss_kernel(%arg0: i32, %arg1: memref<8x1xi32, #tpu.memory_space<vmem>>, %arg2: memref<8x32xf32, #tpu.memory_space<vmem>>, %arg3: memref<128x160xf32, #tpu.memory_space<vmem>>, %arg4: memref<32x128xf32, #tpu.memory_space<vmem>>, %arg5: memref<8x128xf32, #tpu.memory_space<vmem>>) attributes {dimension_semantics = [#tpu.dimension_semantics<parallel>], iteration_bounds = array<i64: 3>, scalar_prefetch = 0 : i64, scratch_operands = 0 : i64, tpu.core_type = #tpu.core_type<tc>, window_params = [{transform_indices = @transform_0, window_bounds = array<i64: 8, 1>}, {transform_indices = @transform_1, window_bounds = array<i64: 8, 32>}, {pipeline_mode = #tpu.pipeline_mode<synchronous>, transform_indices = @transform_2, window_bounds = array<i64: 128, 160>}, {pipeline_mode = #tpu.pipeline_mode<synchronous>, transform_indices = @transform_3, window_bounds = array<i64: 32, 128>}, {transform_indices = @transform_4, window_bounds = array<i64: 8, 128>}]} {
    %0 = tpu.iota {dimensions = array<i32: 0>} : vector<8x1xi32>
    %c8_i32 = arith.constant 8 : i32
    %1 = arith.muli %arg0, %c8_i32 : i32
    %2 = vector.broadcast %1 : i32 to vector<8x1xi32>
    %3 = arith.addi %2, %0 : vector<8x1xi32>
    %c20_i32 = arith.constant 20 : i32
    %4 = vector.broadcast %c20_i32 : i32 to vector<8x1xi32>
    %5 = arith.cmpi slt, %3, %4 : vector<8x1xi32>
    %6 = arith.extui %5 : vector<8x1xi1> to vector<8x1xi32>
    %7 = arith.sitofp %6 : vector<8x1xi32> to vector<8x1xf32>
    %c0 = arith.constant 0 : index
    %c0_0 = arith.constant 0 : index
    %8 = vector.load %arg2[%c0, %c0_0] : memref<8x32xf32, #tpu.memory_space<vmem>>, vector<8x32xf32>
    %cst = arith.constant 0.000000e+00 : f32
    %9 = vector.shape_cast %5 : vector<8x1xi1> to vector<8x1xi1>
    %10 = vector.broadcast %9 : vector<8x1xi1> to vector<8x32xi1>
    %11 = vector.broadcast %cst : f32 to vector<8x32xf32>
    %12 = arith.select %10, %8, %11 : vector<8x32xi1>, vector<8x32xf32>
    %c0_1 = arith.constant 0 : index
    %c0_2 = arith.constant 0 : index
    %13 = vector.load %arg1[%c0_1, %c0_2] : memref<8x1xi32, #tpu.memory_space<vmem>>, vector<8x1xi32>
    %14 = tpu.iota {dimensions = array<i32: 1>} : vector<8x128xi32>
    %15 = vector.broadcast %13 : vector<8x1xi32> to vector<8x128xi32>
    %16 = arith.cmpi eq, %14, %15 : vector<8x128xi32>
    %17 = arith.extui %16 : vector<8x128xi1> to vector<8x128xi32>
    %18 = arith.sitofp %17 : vector<8x128xi32> to vector<8x128xf32>
    %c0_3 = arith.constant 0 : index
    %c0_4 = arith.constant 0 : index
    %19 = vector.load %arg3[%c0_3, %c0_4] : memref<128x160xf32, #tpu.memory_space<vmem>>, vector<128x160xf32>
    %cst_5 = arith.constant dense<0.000000e+00> : vector<8x160xf32>
    %20 = tpu.matmul %18, %19, %cst_5 {dimension_numbers = #tpu.dot_dimension_numbers<[1], [0], [0], [1], [0, 0, 1, 1], [], []>} : vector<8x128xf32>, vector<128x160xf32>, vector<8x160xf32> -> vector<8x160xf32>
    %21 = vector.extract_strided_slice %20 {offsets = [0, 0], sizes = [8, 128], strides = [1, 1]} : vector<8x160xf32> to vector<8x128xf32>
    %22 = vector.extract_strided_slice %20 {offsets = [0, 128], sizes = [8, 32], strides = [1, 1]} : vector<8x160xf32> to vector<8x32xf32>
    %23 = arith.subf %12, %22 : vector<8x32xf32>
    %24 = arith.mulf %23, %23 : vector<8x32xf32>
    %cst_6 = arith.constant dense<0.000000e+00> : vector<8xf32>
    %25 = vector.multi_reduction <add>, %24, %cst_6 [1] : vector<8x32xf32> to vector<8xf32>
    %26 = vector.shape_cast %25 : vector<8xf32> to vector<8x1xf32>
    %27 = arith.mulf %12, %12 : vector<8x32xf32>
    %cst_7 = arith.constant dense<0.000000e+00> : vector<8xf32>
    %28 = vector.multi_reduction <add>, %27, %cst_7 [1] : vector<8x32xf32> to vector<8xf32>
    %29 = vector.shape_cast %28 : vector<8xf32> to vector<8x1xf32>
    %cst_8 = arith.constant 1.000000e+00 : f32
    %30 = vector.broadcast %cst_8 : f32 to vector<8x1xf32>
    %31 = arith.select %5, %29, %30 : vector<8x1xi1>, vector<8x1xf32>
    %32 = math.rsqrt %31 : vector<8x1xf32>
    %33 = vector.broadcast %32 : vector<8x1xf32> to vector<8x32xf32>
    %34 = arith.mulf %12, %33 : vector<8x32xf32>
    %c0_9 = arith.constant 0 : index
    %c0_10 = arith.constant 0 : index
    %35 = vector.load %arg4[%c0_9, %c0_10] : memref<32x128xf32, #tpu.memory_space<vmem>>, vector<32x128xf32>
    %cst_11 = arith.constant dense<0.000000e+00> : vector<8x128xf32>
    %36 = tpu.matmul %34, %35, %cst_11 {dimension_numbers = #tpu.dot_dimension_numbers<[1], [0], [0], [1], [0, 0, 1, 1], [], []>} : vector<8x32xf32>, vector<32x128xf32>, vector<8x128xf32> -> vector<8x128xf32>
    %37 = math.exp %36 : vector<8x128xf32>
    %38 = arith.subf %21, %37 : vector<8x128xf32>
    %39 = arith.mulf %38, %38 : vector<8x128xf32>
    %cst_12 = arith.constant dense<0.000000e+00> : vector<8xf32>
    %40 = vector.multi_reduction <add>, %39, %cst_12 [1] : vector<8x128xf32> to vector<8xf32>
    %41 = vector.shape_cast %40 : vector<8xf32> to vector<8x1xf32>
    %cst_13 = arith.constant 1.000000e-03 : f32
    %42 = vector.broadcast %cst_13 : f32 to vector<8x1xf32>
    %43 = arith.mulf %42, %26 : vector<8x1xf32>
    %cst_14 = arith.constant 2.000000e+00 : f32
    %44 = vector.broadcast %cst_14 : f32 to vector<8x1xf32>
    %45 = arith.mulf %44, %41 : vector<8x1xf32>
    %46 = arith.addf %43, %45 : vector<8x1xf32>
    %47 = arith.mulf %46, %7 : vector<8x1xf32>
    %cst_15 = arith.constant dense<0.000000e+00> : vector<1xf32>
    %48 = vector.multi_reduction <add>, %47, %cst_15 [0] : vector<8x1xf32> to vector<1xf32>
    %49 = vector.shape_cast %48 : vector<1xf32> to vector<1x1xf32>
    %50 = vector.shape_cast %49 : vector<1x1xf32> to vector<1x1xf32>
    %51 = vector.broadcast %50 : vector<1x1xf32> to vector<8x128xf32>
    %c0_16 = arith.constant 0 : index
    %c0_17 = arith.constant 0 : index
    %52 = vector.load %arg5[%c0_16, %c0_17] : memref<8x128xf32, #tpu.memory_space<vmem>>, vector<8x128xf32>
    tpu.vector_store %arg5[%c0_16, %c0_17], %51 {strides = array<i32>} : memref<8x128xf32, #tpu.memory_space<vmem>>, vector<8x128xf32>,
    return
  }
  func.func @transform_0(%arg0: i32) -> (i32, i32) {
    %c0_i32 = arith.constant 0 : i32
    %c0_i32_0 = arith.constant 0 : i32
    return %arg0, %c0_i32 : i32, i32
  }
  func.func @transform_1(%arg0: i32) -> (i32, i32) {
    %c0_i32 = arith.constant 0 : i32
    %c0_i32_0 = arith.constant 0 : i32
    return %arg0, %c0_i32 : i32, i32
  }
  func.func @transform_2(%arg0: i32) -> (i32, i32) {
    %c0_i32 = arith.constant 0 : i32
    %c0_i32_0 = arith.constant 0 : i32
    %c0_i32_1 = arith.constant 0 : i32
    return %c0_i32, %c0_i32_0 : i32, i32
  }
  func.func @transform_3(%arg0: i32) -> (i32, i32) {
    %c0_i32 = arith.constant 0 : i32
    %c0_i32_0 = arith.constant 0 : i32
    %c0_i32_1 = arith.constant 0 : i32
    return %c0_i32, %c0_i32_0 : i32, i32
  }
  func.func @transform_4(%arg0: i32) -> (i32, i32) {
    %c0_i32 = arith.constant 0 : i32
    %c0_i32_0 = arith.constant 0 : i32
    return %arg0, %c0_i32 : i32, i32
  }
}

</mosaic_0001>

<llo_original>
// kernel: tpu_custom_call.1
$region0: #{tpu_custom_call.1}
  #allocation0 [shape = 'u32[]', space=smem, size = 0x4, offset = 0x4, fixed_abs, tag = 'smem constant byte address 0x4 - core index']
  #allocation1 [shape = 'u32[144,128]{1,0:T(1,128)}', space=vmem, size = 0x12000, scoped, tag = 'internal scratch']
  %s0 = inlined_call_operand.vmem [shape: s32[20,1], index: 0, kind: input, shape index: {}]
  %s1 = inlined_call_operand.vmem [shape: f32[20,32], index: 1, kind: input, shape index: {}]
  %s2 = inlined_call_operand.vmem [shape: f32[128,160], index: 2, kind: input, shape index: {}]
  %s3 = inlined_call_operand.vmem [shape: f32[32,128], index: 3, kind: input, shape index: {}]
  %s4 = inlined_call_operand.hbm [shape: f32[24,128], index: 4, kind: output, shape index: {}]
  %s5 = sld [smem:[#allocation0]]
  $region49: #{tpu_custom_call.1} parent=0
    _
  %s7 = ssub.s32 1, %s5
  %s8 = scalar_select 0, %s7, %s5
  $region1: #{tpu_custom_call.1} parent=0
    #allocation2 [shape = 'u8[8192]{0}', space=vmem, size = 0x2000, scoped, tag = 'output window, operand 0']
    #allocation3 [shape = 's32[2]{0}', space=sflag, size = 0x8, scoped, tag = 'scoped memory for tpu_custom_call.1']
    %9 = vsyncpa [#allocation3], 0
    %s10 = scalar_lea.sflag [#allocation3], 1
    %11 = vsyncpa %s10, 0
    loop: start=0, step=1, limit=5
    $region2: #{tpu_custom_call.1} parent=1 // loop_pre_header
      _
    $region3: #{tpu_custom_call.1} parent=1 // loop_header
      %s13 = sphi 0, %s17
      %p14 = scmp.ge.s32.totalorder %s13, 5
      %s23 = sphi 0, %s25
      %s26 = sphi 0, %s23
      %s27 = sphi 0, %s26
      %s43 = sphi 0, %s27
      %s49 = sphi 0, %s51
      %s52 = sphi 0, %s49
      %s53 = sphi 0, %s52
      %s69 = sphi 0, %s53
      %s73 = sphi 0, %s73
      %s75 = sphi 0, %s73
      %s76 = sphi 0, %s75
      %s90 = sphi 0, %s76
      %s94 = sphi 0, %s94
      %s96 = sphi 0, %s94
      %s97 = sphi 0, %s96
      %s111 = sphi 0, %s97
      %s117 = sphi 0, %s119
      %s120 = sphi 0, %s117
      %s121 = sphi 0, %s120
      %s137 = sphi 0, %s121
    $region4: #{tpu_custom_call.1} parent=1 // loop_header_branch
      %16 = sbr.rel (%p14) target = $region8
    $region5: #{tpu_custom_call.1} parent=1 // loop_body
      %s18 = ssub.s32 %s13, 1
      %s19 = ssub.s32 %s13, 2
      %s20 = sadd.s32 %s13, 1
      %s21 = ssub.s32 %s13, %s20
      %p22 = scmp.eq.s32.totalorder %s21, 0
      %s24 = sadd.s32 %s23, 1
      %s25 = scalar_select %p22, %s23, %s24
      %p28 = pneg %p22
      %p29 = scmp.eq.s32.totalorder %s13, 2
      %p30 = por %p28, %p29
      %p31 = scmp.ne.s32.totalorder %s23, %s26
      %p32 = scmp.eq.s32.totalorder %s13, 0
      %p33 = por %p31, %p32
      %p34 = scmp.ne.s32.totalorder %s23, %s26
      %p35 = scmp.eq.s32.totalorder %s18, 2
      %p36 = por %p34, %p35
      %p37 = scmp.ne.s32.totalorder %s26, %s27
      %p38 = scmp.eq.s32.totalorder %s18, 0
      %p39 = por %p37, %p38
      %p40 = scmp.ne.s32.totalorder %s26, %s27
      %p41 = scmp.eq.s32.totalorder %s19, 2
      %p42 = por %p40, %p41
      %p44 = scmp.ne.s32.totalorder %s27, %s43
      %p45 = scmp.eq.s32.totalorder %s19, 0
      %p46 = por %p44, %p45
      %s47 = ssub.s32 %s13, %s20
      %p48 = scmp.eq.s32.totalorder %s47, 0
      %s50 = sadd.s32 %s49, 1
      %s51 = scalar_select %p48, %s49, %s50
      %p54 = pneg %p48
      %p55 = scmp.eq.s32.totalorder %s13, 2
      %p56 = por %p54, %p55
      %p57 = scmp.ne.s32.totalorder %s49, %s52
      %p58 = scmp.eq.s32.totalorder %s13, 0
      %p59 = por %p57, %p58
      %p60 = scmp.ne.s32.totalorder %s49, %s52
      %p61 = scmp.eq.s32.totalorder %s18, 2
      %p62 = por %p60, %p61
      %p63 = scmp.ne.s32.totalorder %s52, %s53
      %p64 = scmp.eq.s32.totalorder %s18, 0
      %p65 = por %p63, %p64
      %p66 = scmp.ne.s32.totalorder %s52, %s53
      %p67 = scmp.eq.s32.totalorder %s19, 2
      %p68 = por %p66, %p67
      %p70 = scmp.ne.s32.totalorder %s53, %s69
      %p71 = scmp.eq.s32.totalorder %s19, 0
      %p72 = por %p70, %p71
      %s74 = sadd.s32 %s73, 1
      %p77 = scmp.eq.s32.totalorder %s13, 2
      %p78 = scmp.ne.s32.totalorder %s73, %s75
      %p79 = scmp.eq.s32.totalorder %s13, 0
      %p80 = por %p78, %p79
      %p81 = scmp.ne.s32.totalorder %s73, %s75
      %p82 = scmp.eq.s32.totalorder %s18, 2
      %p83 = por %p81, %p82
      %p84 = scmp.ne.s32.totalorder %s75, %s76
      %p85 = scmp.eq.s32.totalorder %s18, 0
      %p86 = por %p84, %p85
      %p87 = scmp.ne.s32.totalorder %s75, %s76
      %p88 = scmp.eq.s32.totalorder %s19, 2
      %p89 = por %p87, %p88
      %p91 = scmp.ne.s32.totalorder %s76, %s90
      %p92 = scmp.eq.s32.totalorder %s19, 0
      %p93 = por %p91, %p92
      %s95 = sadd.s32 %s94, 1
      %p98 = scmp.eq.s32.totalorder %s13, 2
      %p99 = scmp.ne.s32.totalorder %s94, %s96
      %p100 = scmp.eq.s32.totalorder %s13, 0
      %p101 = por %p99, %p100
      %p102 = scmp.ne.s32.totalorder %s94, %s96
      %p103 = scmp.eq.s32.totalorder %s18, 2
      %p104 = por %p102, %p103
      %p105 = scmp.ne.s32.totalorder %s96, %s97
      %p106 = scmp.eq.s32.totalorder %s18, 0
      %p107 = por %p105, %p106
      %p108 = scmp.ne.s32.totalorder %s96, %s97
      %p109 = scmp.eq.s32.totalorder %s19, 2
      %p110 = por %p108, %p109
      %p112 = scmp.ne.s32.totalorder %s97, %s111
      %p113 = scmp.eq.s32.totalorder %s19, 0
      %p114 = por %p112, %p113
      %s115 = ssub.s32 %s13, %s20
      %p116 = scmp.eq.s32.totalorder %s115, 0
      %s118 = sadd.s32 %s117, 1
      %s119 = scalar_select %p116, %s117, %s118
      %p122 = pneg %p116
      %p123 = scmp.eq.s32.totalorder %s13, 2
      %p124 = por %p122, %p123
      %p125 = scmp.ne.s32.totalorder %s117, %s120
      %p126 = scmp.eq.s32.totalorder %s13, 0
      %p127 = por %p125, %p126
      %p128 = scmp.ne.s32.totalorder %s117, %s120
      %p129 = scmp.eq.s32.totalorder %s18, 2
      %p130 = por %p128, %p129
      %p131 = scmp.ne.s32.totalorder %s120, %s121
      %p132 = scmp.eq.s32.totalorder %s18, 0
      %p133 = por %p131, %p132
      %p134 = scmp.ne.s32.totalorder %s120, %s121
      %p135 = scmp.eq.s32.totalorder %s19, 2
      %p136 = por %p134, %p135
      %p138 = scmp.ne.s32.totalorder %s121, %s137
      %p139 = scmp.eq.s32.totalorder %s19, 0
      %p140 = por %p138, %p139
      %p141 = scmp.le.s32.totalorder 1, %s13
      %p142 = scmp.lt.s32.totalorder %s13, 4
      %p143 = pnand %p141, %p142
      %p144 = pneg %p143
      // Predicated region
      $region9: #{tpu_custom_call.1} parent=5 // pred_check
        _
      $region10: #{tpu_custom_call.1} parent=5 // pred_check_branch
        %146 = sbr.rel (%p143) target = $region12
      $region11: #{tpu_custom_call.1} parent=5 // pred_region
        %s147 = ssub.s32 %s13, 1
        // Predicated region
        $region13: #{tpu_custom_call.1} parent=11 // pred_check
          %p148 = pneg %p86
        $region14: #{tpu_custom_call.1} parent=11 // pred_check_branch
          %150 = sbr.rel (%p148) target = $region16
        $region15: #{tpu_custom_call.1} parent=11 // pred_region
          _
        $region16: #{tpu_custom_call.1} parent=11 // pred_fallthru
          _
        // Predicated region
        $region17: #{tpu_custom_call.1} parent=11 // pred_check
          %p151 = pneg %p107
        $region18: #{tpu_custom_call.1} parent=11 // pred_check_branch
          %153 = sbr.rel (%p151) target = $region20
        $region19: #{tpu_custom_call.1} parent=11 // pred_region
          _
        $region20: #{tpu_custom_call.1} parent=11 // pred_fallthru
          _
      $region12: #{tpu_custom_call.1} parent=5 // pred_fallthru
        _
      %p154 = scmp.lt.s32.totalorder %s13, 3
      // Predicated region
      $region21: #{tpu_custom_call.1} parent=5 // pred_check
        %p155 = pneg %p154
      $region22: #{tpu_custom_call.1} parent=5 // pred_check_branch
        %157 = sbr.rel (%p155) target = $region24
      $region23: #{tpu_custom_call.1} parent=5 // pred_region
        // Predicated region
        $region25: #{tpu_custom_call.1} parent=23 // pred_check
          %p158 = pneg %p33
        $region26: #{tpu_custom_call.1} parent=23 // pred_check_branch
          %160 = sbr.rel (%p158) target = $region28
        $region27: #{tpu_custom_call.1} parent=23 // pred_region
          %p161 = scmp.lt.s32.totalorder %s13, 2
          %s162 = scalar_select %p161, %s13, 2
          %s163 = smul.addr %s162, 8
          %s164 = scalar_lea.vmem %s0, %s163
        $region28: #{tpu_custom_call.1} parent=23 // pred_fallthru
          _
        // Predicated region
        $region29: #{tpu_custom_call.1} parent=23 // pred_check
          %p165 = pneg %p59
        $region30: #{tpu_custom_call.1} parent=23 // pred_check_branch
          %167 = sbr.rel (%p165) target = $region32
        $region31: #{tpu_custom_call.1} parent=23 // pred_region
          %p168 = scmp.lt.s32.totalorder %s13, 2
          %s169 = scalar_select %p168, %s13, 2
          %s170 = smul.addr %s169, 8
          %s171 = scalar_lea.vmem %s1, %s170
        $region32: #{tpu_custom_call.1} parent=23 // pred_fallthru
          _
      $region24: #{tpu_custom_call.1} parent=5 // pred_fallthru
        _
      %p172 = scmp.le.s32.totalorder 1, %s13
      %p173 = scmp.lt.s32.totalorder %s13, 4
      %p174 = pnand %p172, %p173
      %p175 = pneg %p174
      // Predicated region
      $region33: #{tpu_custom_call.1} parent=5 // pred_check
        _
      $region34: #{tpu_custom_call.1} parent=5 // pred_check_branch
        %177 = sbr.rel (%p174) target = $region36
      $region35: #{tpu_custom_call.1} parent=5 // pred_region
        %s178 = ssub.s32 %s13, 1
        %p179 = scmp.lt.s32.totalorder %s18, 2
        %s180 = scalar_select %p179, %s18, 2
        %s181 = smul.addr %s180, 8
        %s182 = scalar_lea.vmem %s0, %s181
        %p183 = pneg %p39
        %p184 = pneg %p36
        %p185 = scmp.lt.s32.totalorder %s18, 2
        %s186 = scalar_select %p185, %s18, 2
        %s187 = smul.addr %s186, 8
        %s188 = scalar_lea.vmem %s1, %s187
        %p189 = pneg %p65
        %p190 = pneg %p62
        %p191 = pneg %p86
        %p192 = pneg %p83
        %p193 = pneg %p107
        %p194 = pneg %p104
        %p195 = pneg %p133
        %p196 = pneg %p130
        %s197 = sand.u32 %s120, 1
        %s198 = scalar_lea.sflag [#allocation3], %s197
        %s199 = sand.u32 %s120, 1
        %s200 = smul.addr %s199, 8
        %s201 = scalar_lea.vmem [#allocation2], %s200
        %p202 = scmp.lt.s32.totalorder %s18, 2
        %s203 = scalar_select %p202, %s18, 2
        %s204 = smul.addr %s203, 8
        %s205 = scalar_lea.vmem %s0, %s204
        %p206 = scmp.lt.s32.totalorder %s18, 2
        %s207 = scalar_select %p206, %s18, 2
        %s208 = smul.addr %s207, 8
        %s209 = scalar_lea.vmem %s1, %s208
        %v210 = vlaneseq
        %v211 = vshrl.u32 %v210, 7
        %s212 = smul.u32 %s18, 8
        %v213 = vstv %s212
        %v214 = vadd.s32 %v213, %v211
        %vm215 = vcmp.lt.s32.totalorder %v214, 20
        %v216 = vsel %vm215, 1, 0
        %v217 = vcvt.s32.f32 %v216
        %v218 = vld [vmem:[%s209] sm:$0xff]
        %vm219 = vcmp.eq.s32.totalorder %v216, 1
        %v220 = vsel %vm219, %v218, 0.0
        %v221 = vld [vmem:[%s205] sm:$0xff]
        %v222 = vlaneseq
        %v223 = vand.u32 %v222, 127
        %224 = vset.pattern.permute.xlu0 0
        %225 = vperm.xlu0 %224, %v221
        %v226 = vpop.permute.xlu0 %225
        %vm227 = vcmp.eq.s32.totalorder %v223, %v226
        %v228 = vsel %vm227, 1, 0
        %v229 = vcvt.s32.f32 %v228
        %v230 = vld [vmem:[%s2] sm:$0xff]
        %v231 = vld [vmem:[%s2 + $0x8] sm:$0xff]
        %v232 = vld [vmem:[%s2 + $0x10] sm:$0xff]
        %v233 = vld [vmem:[%s2 + $0x18] sm:$0xff]
        %v234 = vld [vmem:[%s2 + $0x20] sm:$0xff]
        %v235 = vld [vmem:[%s2 + $0x28] sm:$0xff]
        %v236 = vld [vmem:[%s2 + $0x30] sm:$0xff]
        %v237 = vld [vmem:[%s2 + $0x38] sm:$0xff]
        %v238 = vld [vmem:[%s2 + $0x40] sm:$0xff]
        %v239 = vld [vmem:[%s2 + $0x48] sm:$0xff]
        %v240 = vld [vmem:[%s2 + $0x50] sm:$0xff]
        %v241 = vld [vmem:[%s2 + $0x58] sm:$0xff]
        %v242 = vld [vmem:[%s2 + $0x60] sm:$0xff]
        %v243 = vld [vmem:[%s2 + $0x68] sm:$0xff]
        %v244 = vld [vmem:[%s2 + $0x70] sm:$0xff]
        %v245 = vld [vmem:[%s2 + $0x78] sm:$0xff]
        %v246 = vld [vmem:[%s2 + $0x80] sm:$0xff]
        %v247 = vld [vmem:[%s2 + $0x88] sm:$0xff]
        %v248 = vld [vmem:[%s2 + $0x90] sm:$0xff]
        %v249 = vld [vmem:[%s2 + $0x98] sm:$0xff]
        %v250 = vld [vmem:[%s2 + $0xa0] sm:$0xff]
        %v251 = vld [vmem:[%s2 + $0xa8] sm:$0xff]
        %v252 = vld [vmem:[%s2 + $0xb0] sm:$0xff]
        %v253 = vld [vmem:[%s2 + $0xb8] sm:$0xff]
        %v254 = vld [vmem:[%s2 + $0xc0] sm:$0xff]
        %v255 = vld [vmem:[%s2 + $0xc8] sm:$0xff]
        %v256 = vld [vmem:[%s2 + $0xd0] sm:$0xff]
        %v257 = vld [vmem:[%s2 + $0xd8] sm:$0xff]
        %v258 = vld [vmem:[%s2 + $0xe0] sm:$0xff]
        %v259 = vld [vmem:[%s2 + $0xe8] sm:$0xff]
        %v260 = vld [vmem:[%s2 + $0xf0] sm:$0xff]
        %v261 = vld [vmem:[%s2 + $0xf8] sm:$0xff]
        %262 = vmatprep.subr.mxu0 %v261
        %263 = vmatpush1.msra.mxu0 %v260
        %264 = vmatprep.subr.mxu0 %v259
        %265 = vmatpush1.msra.mxu0 %v258
        %266 = vmatprep.subr.mxu0 %v257
        %267 = vmatpush1.msra.mxu0 %v256
        %268 = vmatprep.subr.mxu0 %v255
        %269 = vmatpush1.msra.mxu0 %v254
        %270 = vmatprep.subr.mxu0 %v253
        %271 = vmatpush1.msra.mxu0 %v252
        %272 = vmatprep.subr.mxu0 %v251
        %273 = vmatpush1.msra.mxu0 %v250
        %274 = vmatprep.subr.mxu0 %v249
        %275 = vmatpush1.msra.mxu0 %v248
        %276 = vmatprep.subr.mxu0 %v247
        %277 = vmatpush1.msra.mxu0 %v246
        %278 = vmatprep.subr.mxu0 %v245
        %279 = vmatpush1.msra.mxu0 %v244
        %280 = vmatprep.subr.mxu0 %v243
        %281 = vmatpush1.msra.mxu0 %v242
        %282 = vmatprep.subr.mxu0 %v241
        %283 = vmatpush1.msra.mxu0 %v240
        %284 = vmatprep.subr.mxu0 %v239
        %285 = vmatpush1.msra.mxu0 %v238
        %286 = vmatprep.subr.mxu0 %v237
        %287 = vmatpush1.msra.mxu0 %v236
        %288 = vmatprep.subr.mxu0 %v235
        %289 = vmatpush1.msra.mxu0 %v234
        %290 = vmatprep.subr.mxu0 %v233
        %291 = vmatpush1.msra.mxu0 %v232
        %292 = vmatprep.subr.mxu0 %v231
        %293 = vmatpush1.msra.mxu0 %v230
        %294 = vmatprep.subr.mxu0 0.0
        %295 = vmatpush2.msra.mxu0 0.0
        %296 = vmatprep.subr.mxu0 0.0
        %297 = vmatpush2.msra.mxu0 0.0
        %298 = vmatprep.subr.mxu0 0.0
        %299 = vmatpush2.msra.mxu0 0.0
        %300 = vmatprep.subr.mxu0 0.0
        %301 = vmatpush2.msra.mxu0 0.0
        %302 = vmatprep.subr.mxu0 0.0
        %303 = vmatpush2.msra.mxu0 0.0
        %304 = vmatprep.subr.mxu0 0.0
        %305 = vmatpush2.msra.mxu0 0.0
        %306 = vmatprep.subr.mxu0 0.0
        %307 = vmatpush2.msra.mxu0 0.0
        %308 = vmatprep.subr.mxu0 0.0
        %309 = vmatpush2.msra.mxu0 0.0
        %310 = vmatprep.subr.mxu0 0.0
        %311 = vmatpush2.msra.mxu0 0.0
        %312 = vmatprep.subr.mxu0 0.0
        %313 = vmatpush2.msra.mxu0 0.0
        %314 = vmatprep.subr.mxu0 0.0
        %315 = vmatpush2.msra.mxu0 0.0
        %316 = vmatprep.subr.mxu0 0.0
        %317 = vmatpush2.msra.mxu0 0.0
        %318 = vmatprep.subr.mxu0 0.0
        %319 = vmatpush2.msra.mxu0 0.0
        %320 = vmatprep.subr.mxu0 0.0
        %321 = vmatpush2.msra.mxu0 0.0
        %322 = vmatprep.subr.mxu0 0.0
        %323 = vmatpush2.msra.mxu0 0.0
        %324 = vmatprep.subr.mxu0 0.0
        %325 = vmatpush2.msra.mxu0 0.0
        %326 = vmatprep.mubr.f32.mxu0 0.0
        %327 = vmatmul.mubr.f32.gmra.mxu0 %v229
        %v328 = vpop.f32.mrf.mxu0
        %v329 = vadd.f32 0.0, %v328
        %v330 = vpop.f32.mrf.mxu0
        %v331 = vadd.f32 0.0, %v330
        %332 = vdwg.mxu0
        %v333 = vsub.f32 %v220, %v331
        %v334 = vmul.f32 %v333, %v333
        %vm335 = vcmask 261120
        %v336 = vsel %vm335, %v334, 0.0
        %337 = vadd.xlane.f32.xlu0 %v336
        %v338 = vpop.xlane.xlu0 %337
        %v339 = vmul.f32 %v220, %v220
        %v340 = vsel %vm335, %v339, 0.0
        %341 = vadd.xlane.f32.xlu0 %v340
        %v342 = vpop.xlane.xlu0 %341
        %v343 = vsel %vm215, %v342, 1.0
        %v344 = vrsqrt.pop %v343
        %v345 = vmul.f32 %v220, %v344
        %v346 = vld [vmem:[%s3] sm:$0xff]
        %v347 = vld [vmem:[%s3 + $0x8] sm:$0xff]
        %v348 = vld [vmem:[%s3 + $0x10] sm:$0xff]
        %v349 = vld [vmem:[%s3 + $0x18] sm:$0xff]
        %v351 = vsel %vm335, %v345, 0
        %353 = vmatprep.subr.mxu0 0.0
        %354 = vmatpush1.msra.mxu0 0.0
        %355 = vmatprep.subr.mxu0 0.0
        %356 = vmatpush1.msra.mxu0 0.0
        %357 = vmatprep.subr.mxu0 0.0
        %358 = vmatpush1.msra.mxu0 0.0
        %359 = vmatprep.subr.mxu0 0.0
        %360 = vmatpush1.msra.mxu0 0.0
        %361 = vmatprep.subr.mxu0 0.0
        %362 = vmatpush1.msra.mxu0 0.0
        %363 = vmatprep.subr.mxu0 0.0
        %364 = vmatpush1.msra.mxu0 0.0
        %365 = vmatprep.subr.mxu0 0.0
        %366 = vmatpush1.msra.mxu0 0.0
        %367 = vmatprep.subr.mxu0 0.0
        %368 = vmatpush1.msra.mxu0 0.0
        %369 = vmatprep.subr.mxu0 0.0
        %370 = vmatpush1.msra.mxu0 0.0
        %371 = vmatprep.subr.mxu0 0.0
        %372 = vmatpush1.msra.mxu0 0.0
        %373 = vmatprep.subr.mxu0 0.0
        %374 = vmatpush1.msra.mxu0 0.0
        %375 = vmatprep.subr.mxu0 0.0
        %376 = vmatpush1.msra.mxu0 0.0
        %377 = vmatprep.subr.mxu0 0.0
        %378 = vmatpush1.msra.mxu0 %v349
        %379 = vmatprep.subr.mxu0 0.0
        %380 = vmatpush1.msra.mxu0 %v348
        %381 = vmatprep.subr.mxu0 0.0
        %382 = vmatpush1.msra.mxu0 %v347
        %383 = vmatprep.subr.mxu0 0.0
        %384 = vmatpush1.msra.mxu0 %v346
        %385 = vmatprep.subr.mxu0 0.0
        %386 = vmatpush2.msra.mxu0 0.0
        %387 = vmatprep.subr.mxu0 0.0
        %388 = vmatpush2.msra.mxu0 0.0
        %389 = vmatprep.subr.mxu0 0.0
        %390 = vmatpush2.msra.mxu0 0.0
        %391 = vmatprep.subr.mxu0 0.0
        %392 = vmatpush2.msra.mxu0 0.0
        %393 = vmatprep.subr.mxu0 0.0
        %394 = vmatpush2.msra.mxu0 0.0
        %395 = vmatprep.subr.mxu0 0.0
        %396 = vmatpush2.msra.mxu0 0.0
        %397 = vmatprep.subr.mxu0 0.0
        %398 = vmatpush2.msra.mxu0 0.0
        %399 = vmatprep.subr.mxu0 0.0
        %400 = vmatpush2.msra.mxu0 0.0
        %401 = vmatprep.subr.mxu0 0.0
        %402 = vmatpush2.msra.mxu0 0.0
        %403 = vmatprep.subr.mxu0 0.0
        %404 = vmatpush2.msra.mxu0 0.0
        %405 = vmatprep.subr.mxu0 0.0
        %406 = vmatpush2.msra.mxu0 0.0
        %407 = vmatprep.subr.mxu0 0.0
        %408 = vmatpush2.msra.mxu0 0.0
        %409 = vmatprep.subr.mxu0 0.0
        %410 = vmatpush2.msra.mxu0 0.0
        %411 = vmatprep.subr.mxu0 0.0
        %412 = vmatpush2.msra.mxu0 0.0
        %413 = vmatprep.subr.mxu0 0.0
        %414 = vmatpush2.msra.mxu0 0.0
        %415 = vmatprep.subr.mxu0 0.0
        %416 = vmatpush2.msra.mxu0 0.0
        %417 = vmatprep.mubr.f32.mxu0 0.0
        %418 = vmatmul.mubr.f32.gmra.mxu0 %v351
        %v419 = vpop.f32.mrf.mxu0
        %v420 = vadd.f32 0.0, %v419
        %v421 = vpop.f32.mrf.mxu0
        %422 = vdwg.mxu0
        %v423 = vmul.f32 %v420, 1.442695
        %v424 = vpow.pop %v423
        %v425 = vsub.f32 %v329, %v424
        %v426 = vmul.f32 %v425, %v425
        %427 = vadd.xlane.f32.xlu0 %v426
        %v428 = vpop.xlane.xlu0 %427
        %v429 = vmul.f32 %v338, 0.001
        %v430 = vmul.f32 %v428, 2.0
        %v431 = vadd.f32 %v429, %v430
        %v432 = vmul.f32 %v431, %v217
        %v433 = vrot.slane %v432, 4
        %v434 = vadd.f32 %v432, %v433
        %v435 = vrot.slane %v434, 2
        %v436 = vadd.f32 %v434, %v435
        %v437 = vrot.slane %v436, 1
        %v438 = vadd.f32 %v436, %v437
        %439 = vst [vmem:[%s201] sm:$0xff] %v438
        %s440 = sand.u32 %s120, 1
        %s441 = scalar_lea.sflag [#allocation3], %s440
        %s442 = sand.u32 %s120, 1
        %s443 = smul.addr %s442, 8
        %s444 = scalar_lea.vmem [#allocation2], %s443
        // Predicated region
        $region37: #{tpu_custom_call.1} parent=35 // pred_check
          %p445 = pneg %p130
        $region38: #{tpu_custom_call.1} parent=35 // pred_check_branch
          %447 = sbr.rel (%p445) target = $region40
        $region39: #{tpu_custom_call.1} parent=35 // pred_region
          %s449 = ssub.s32 128, 128
          %450 = vsyncadd %s441, %s449
          %s451 = smul.addr %s18, 128
          %s452 = scalar_lea.hbm %s4, %s451
          %s454 = sshll.u32 %s444, 4
          %s455 = int_to_ptr.vmem [resolvable:$true] %s454
          %457 = dma.vmem_to_hbm [thread:$0]  %s455, 128, %s452, %s441
        $region40: #{tpu_custom_call.1} parent=35 // pred_fallthru
          _
      $region36: #{tpu_custom_call.1} parent=5 // pred_fallthru
        _
      %p458 = scmp.le.s32.totalorder 2, %s13
      // Predicated region
      $region41: #{tpu_custom_call.1} parent=5 // pred_check
        %p459 = pneg %p458
      $region42: #{tpu_custom_call.1} parent=5 // pred_check_branch
        %461 = sbr.rel (%p459) target = $region44
      $region43: #{tpu_custom_call.1} parent=5 // pred_region
        %s462 = ssub.s32 %s13, 2
        // Predicated region
        $region45: #{tpu_custom_call.1} parent=43 // pred_check
          %p463 = pneg %p136
        $region46: #{tpu_custom_call.1} parent=43 // pred_check_branch
          %465 = sbr.rel (%p463) target = $region48
        $region47: #{tpu_custom_call.1} parent=43 // pred_region
          %s466 = sand.u32 %s121, 1
          %s467 = scalar_lea.sflag [#allocation3], %s466
          %s468 = sand.u32 %s121, 1
          %s469 = smul.addr %s468, 8
          %s470 = scalar_lea.vmem [#allocation2], %s469
          %471 = dma.done %s467, 128
        $region48: #{tpu_custom_call.1} parent=43 // pred_fallthru
          _
      $region44: #{tpu_custom_call.1} parent=5 // pred_fallthru
        _
    $region6: #{tpu_custom_call.1} parent=1 // loop_footer
      %s17 = sadd.s32 1, %s13
    $region7: #{tpu_custom_call.1} parent=1 // loop_footer_branch
      %12 = sbr.rel target = $region3
    $region8: #{tpu_custom_call.1} parent=1 // loop_exit
      _
    %472 = vsyncpa [#allocation3], 1
    %s473 = scalar_lea.sflag [#allocation3], 1
    %474 = vsyncpa %s473, 1

</llo_original>
